<compile_context>
chip_gen: v6e
topology: v6e:2x2x1
jax: 0.10.0
libtpu: 0.0.40
codegen_flags: <defaults>
</compile_context>

<pallas_src>
import functools

import jax
import jax.numpy as jnp
from jax.experimental import pallas as pl
from jax.experimental.pallas import tpu as pltpu

_LANE = 128
_SUBLANE = 8


def _round_up(x, m):
    return ((x + m - 1) // m) * m


def _skip_enabled(skip_connections, i):
    """Mirror PyTorch's type-based skip_connections handling."""
    if type(skip_connections) is bool:
        return skip_connections
    if type(skip_connections) is int:
        return i % skip_connections == 0
    return False


# ---------------------------------------------------------------------------
# Fused MLP kernel: one grid step = one batch tile through the whole network.
# ---------------------------------------------------------------------------
def _fused_mlp_kernel(x_ref, *refs, num_layers, apply_act, skip_layer,
                      neg_slope):
    # refs = (w0, b0, w1, b1, ..., w_{n-1}, b_{n-1}, o_ref); statically
    # unrolled.  Weights are bf16 (MXU-native), accumulation + epilogue f32.
    o_ref = refs[-1]
    h = x_ref[...].astype(jnp.float32)
    for i in range(num_layers):
        w = refs[2 * i][...]                       # bf16 (din_pad, dout_pad)
        b = refs[2 * i + 1][...]                   # f32  (1, dout_pad)
        y = jnp.dot(h.astype(w.dtype), w,
                    preferred_element_type=jnp.float32) + b
        if apply_act[i]:
            y = jnp.where(y >= 0, y, jnp.float32(neg_slope) * y)
        if skip_layer[i]:
            y = y + h                              # fused skip add (VPU, f32)
        h = y
    o_ref[...] = h.astype(o_ref.dtype)


# ---------------------------------------------------------------------------
# Parameter handling
# ---------------------------------------------------------------------------
def init_params(key, ks):
    """One (W, b) per layer, W stored (in, out) (transposed vs PyTorch)."""
    params = []
    for i in range(len(ks) - 1):
        key, kw, kb = jax.random.split(key, 3)
        bound = 1.0 / float(ks[i]) ** 0.5
        w = jax.random.uniform(kw, (ks[i], ks[i + 1]), jnp.float32,
                               minval=-bound, maxval=bound)
        b = jax.random.uniform(kb, (ks[i + 1],), jnp.float32,
                               minval=-bound, maxval=bound)
        params.append((w, b))
    return params


def prepare_params(params, ks, *, skip_connections=False, fold_first=True,
                   mxu_dtype=jnp.bfloat16):
    """One-time parameter prep (outside the hot path).

    * Folds linear[0] into linear[1] when legal (no activation/batchnorm in
      between, no skip taken at i=1): saves one matmul per batch tile.
    * Pads interior feature dims to multiples of 128 (lane-dense MXU tiles);
      the network input and output keep their true widths.
    * Weights cast to bf16, biases kept f32 (1, dout).
    Returns (padded_params, pdims, apply_act, skip_layer).
    """
    L = len(params)
    assert L == len(ks) - 1 and L >= 1
    apply_act = [1 <= i <= L - 2 for i in range(L)]
    skip_layer = [(1 <= i <= L - 2) and _skip_enabled(skip_connections, i)
                  and ks[i] == ks[i + 1] for i in range(L)]
    ws = [jnp.asarray(w, jnp.float32) for w, _ in params]
    bs = [jnp.asarray(b, jnp.float32) for _, b in params]
    dims = list(ks)

    if fold_first and L >= 2 and not skip_layer[1]:
        w01 = ws[0] @ ws[1]                 # (ks[0], ks[2])
        b01 = bs[0] @ ws[1] + bs[1]         # (ks[2],)
        ws = [w01] + ws[2:]
        bs = [b01] + bs[2:]
        apply_act = apply_act[1:]           # folded layer keeps layer 1's flags
        skip_layer = skip_layer[1:]
        dims = [dims[0]] + dims[2:]

    n = len(ws)
    # True width at the ends, 128-padded in the interior.
    pdims = [dims[0]] + [_round_up(d, _LANE) for d in dims[1:-1]] + [dims[-1]]
    padded = []
    for i in range(n):
        din, dout = dims[i], dims[i + 1]
        pin, pout = pdims[i], pdims[i + 1]
        wp = jnp.zeros((pin, pout), jnp.float32).at[:din, :dout].set(ws[i])
        bp = jnp.zeros((1, pout), jnp.float32).at[:, :dout].set(bs[i])
        padded.append((wp.astype(mxu_dtype), bp))
    return padded, tuple(pdims), tuple(apply_act), tuple(skip_layer)


# ---------------------------------------------------------------------------
# Tiling / VMEM budget helpers
# ---------------------------------------------------------------------------
def _choose_batch_tile(B, max_tile=512):
    """Sublane-aligned batch tile: minimize over-padding, prefer >=2 grid
    steps (feeds both v7x TensorCores) and >=256 rows when B is large."""
    max_tile = max(_SUBLANE, (max_tile // _SUBLANE) * _SUBLANE)
    B8 = _round_up(max(B, 1), _SUBLANE)
    if B8 <= 2 * _SUBLANE:
        return B8, B8
    tb = min(max_tile, _round_up(pl.cdiv(B8, 2), _SUBLANE))
    best_tb, best_pad = tb, _round_up(B8, tb) - B8
    if best_pad:
        lo = 256 if tb > 256 else _SUBLANE
        for cand in range(tb, lo - 1, -_SUBLANE):
            pad = _round_up(B8, cand) - B8
            if pad < best_pad:
                best_tb, best_pad = cand, pad
                if pad == 0:
                    break
    return best_tb, _round_up(B8, best_tb)


def _vmem_limit_bytes(padded_params, TB, in_width, out_width, io_itemsize,
                      pdims):
    # Weight/bias blocks have constant index maps -> re-DMA is skipped after
    # step 0, but the default pipeline still allocates a second buffer, so
    # budget 2x (bf16 storage already halved the footprint).
    param_bytes = sum(w.size * w.dtype.itemsize + b.size * b.dtype.itemsize
                      for w, b in padded_params)
    io_bytes = (2 * TB * _round_up(in_width, _LANE) * io_itemsize
                + 2 * TB * _round_up(out_width, _LANE) * io_itemsize)
    act_bytes = 4 * TB * _round_up(max(pdims), _LANE) * 4    # f32 temporaries
    need = 2 * param_bytes + io_bytes + act_bytes
    # Floor at 32 MiB (>= default scoped limit everywhere), cap at 64 MiB
    # (v7x physical VMEM per TensorCore).
    return int(min(max(need * 3 // 2 + (1 << 20), 32 << 20), 64 << 20))


# ---------------------------------------------------------------------------
# Forward pass (fused, single pallas_call)
# ---------------------------------------------------------------------------
def leapfrog_independent_forward(x, padded_params, *, pdims, apply_act,
                                 skip_layer, neg_slope=0.01, batch_tile=512):
    n = len(padded_params)
    assert n >= 1 and n == len(pdims) - 1 == len(apply_act) == len(skip_layer)
    B, K0 = x.shape
    assert K0 == pdims[0]
    out_width = pdims[-1]

    TB, Bpad = _choose_batch_tile(B, batch_tile)
    # Only the batch dim is ever padded (zero rows, sliced off below); feature
    # dims keep their true width so there is no (B, 128)-wide HBM copy of x.
    x_in = x if Bpad == B else jnp.pad(x, ((0, Bpad - B), (0, 0)))

    kernel = functools.partial(
        _fused_mlp_kernel, num_layers=n, apply_act=apply_act,
        skip_layer=skip_layer, neg_slope=neg_slope)

    # Constant block index -> weights/biases stay VMEM-resident across batch
    # tiles (no per-step re-DMA).
    in_specs = [pl.BlockSpec((TB, K0), lambda i: (i, 0))]
    flat_params = []
    for wp, bp in padded_params:
        in_specs.append(pl.BlockSpec(wp.shape, lambda i: (0, 0)))
        in_specs.append(pl.BlockSpec(bp.shape, lambda i: (0, 0)))
        flat_params.extend((wp, bp))

    out = pl.pallas_call(
        kernel,
        out_shape=jax.ShapeDtypeStruct((Bpad, out_width), x.dtype),
        grid=(Bpad // TB,),
        in_specs=in_specs,
        out_specs=pl.BlockSpec((TB, out_width), lambda i: (i, 0)),
        compiler_params=pltpu.CompilerParams(
            dimension_semantics=("parallel",),
            vmem_limit_bytes=_vmem_limit_bytes(
                padded_params, TB, K0, out_width,
                jnp.dtype(x.dtype).itemsize, pdims),
        ),
    )(x_in, *flat_params)

    return out if Bpad == B else out[:B]


# ---------------------------------------------------------------------------
# Pure-JAX reference (mirrors PyTorch forward exactly, unfolded f32 params)
# ---------------------------------------------------------------------------
def _reference_forward(x, params, ks, *, skip_connections=False,
                       neg_slope=0.01):
    L = len(params)
    w0, b0 = params[0]
    h = x @ w0 + b0
    for i in range(1, L - 1):
        wi, bi = params[i]
        y = h @ wi + bi
        y = jnp.where(y >= 0, y, neg_slope * y)
        if y.shape == h.shape and _skip_enabled(skip_connections, i):
            y = y + h
        h = y
    if L > 1:
        wL, bL = params[-1]
        h = h @ wL + bL
    return h


if __name__ == "__main__":
    key = jax.random.PRNGKey(0)

    def run_case(key, ks, batch, skip_connections):
        key, kx, kp = jax.random.split(key, 3)
        x = jax.random.normal(kx, (batch, ks[0]), jnp.float32)
        params = init_params(kp, ks)
        padded, pdims, act, skip = prepare_params(
            params, ks, skip_connections=skip_connections)
        fwd = jax.jit(functools.partial(
            leapfrog_independent_forward, pdims=pdims, apply_act=act,
            skip_layer=skip))
        out = jax.block_until_ready(fwd(x, padded))
        ref = _reference_forward(x, params, ks,
                                 skip_connections=skip_connections)
        assert out.shape == (batch, ks[-1]), out.shape
        # bf16 MXU operands + layer-0/1 fold -> ~1e-2-level deviation vs the
        # full-f32 reference; structural bugs would be O(1).
        err = float(jnp.max(jnp.abs(out - ref)))
        assert jnp.allclose(out, ref, atol=5e-2, rtol=5e-2), err
        return key

    # 1) default config (no skip connections) -> layer-0/1 fold is active
    key = run_case(key, [32, 64, 64, 16], 8, False)
    # 2) skip connections enabled (skip taken at i=1 -> no fold)
    key = run_case(key, [32, 64, 64, 64, 16], 8, True)
    # 3) single linear layer + batch that needs row padding (12 -> 16)
    key = run_case(key, [32, 48], 12, False)

    print("KERNEL_OK")
</pallas_src>

<mosaic_0001>
module attributes {stable_mosaic.version = 11 : i64} {
  func.func @_fused_mlp_kernel(%arg0: i32, %arg1: memref<8x32xf32, #tpu.memory_space<vmem>>, %arg2: memref<32x128xbf16, #tpu.memory_space<vmem>>, %arg3: memref<1x128xf32, #tpu.memory_space<vmem>>, %arg4: memref<128x16xbf16, #tpu.memory_space<vmem>>, %arg5: memref<1x16xf32, #tpu.memory_space<vmem>>, %arg6: memref<8x16xf32, #tpu.memory_space<vmem>>) attributes {dimension_semantics = [#tpu.dimension_semantics<parallel>], iteration_bounds = array<i64: 1>, scalar_prefetch = 0 : i64, scratch_operands = 0 : i64, tpu.core_type = #tpu.core_type<tc>, window_params = [{transform_indices = @transform_0, window_bounds = array<i64: 8, 32>}, {pipeline_mode = #tpu.pipeline_mode<synchronous>, transform_indices = @transform_1, window_bounds = array<i64: 32, 128>}, {pipeline_mode = #tpu.pipeline_mode<synchronous>, transform_indices = @transform_2, window_bounds = array<i64: 1, 128>}, {pipeline_mode = #tpu.pipeline_mode<synchronous>, transform_indices = @transform_3, window_bounds = array<i64: 128, 16>}, {pipeline_mode = #tpu.pipeline_mode<synchronous>, transform_indices = @transform_4, window_bounds = array<i64: 1, 16>}, {transform_indices = @transform_5, window_bounds = array<i64: 8, 16>}]} {
    %c0 = arith.constant 0 : index
    %c0_0 = arith.constant 0 : index
    %0 = vector.load %arg1[%c0, %c0_0] : memref<8x32xf32, #tpu.memory_space<vmem>>, vector<8x32xf32>
    %c0_1 = arith.constant 0 : index
    %c0_2 = arith.constant 0 : index
    %1 = vector.load %arg2[%c0_1, %c0_2] : memref<32x128xbf16, #tpu.memory_space<vmem>>, vector<32x128xbf16>
    %c0_3 = arith.constant 0 : index
    %c0_4 = arith.constant 0 : index
    %2 = vector.load %arg3[%c0_3, %c0_4] : memref<1x128xf32, #tpu.memory_space<vmem>>, vector<1x128xf32>
    %3 = arith.truncf %0 : vector<8x32xf32> to vector<8x32xbf16>
    %cst = arith.constant dense<0.000000e+00> : vector<8x128xf32>
    %4 = tpu.matmul %3, %1, %cst {dimension_numbers = #tpu.dot_dimension_numbers<[1], [0], [0], [1], [0, 0, 1, 1], [], []>} : vector<8x32xbf16>, vector<32x128xbf16>, vector<8x128xf32> -> vector<8x128xf32>
    %5 = vector.broadcast %2 : vector<1x128xf32> to vector<8x128xf32>
    %6 = arith.addf %4, %5 : vector<8x128xf32>
    %cst_5 = arith.constant 0.000000e+00 : f32
    %7 = vector.broadcast %cst_5 : f32 to vector<8x128xf32>
    %8 = arith.cmpf oge, %6, %7 : vector<8x128xf32>
    %cst_6 = arith.constant 0.00999999977 : f32
    %9 = vector.broadcast %cst_6 : f32 to vector<8x128xf32>
    %10 = arith.mulf %9, %6 : vector<8x128xf32>
    %11 = arith.select %8, %6, %10 : vector<8x128xi1>, vector<8x128xf32>
    %c0_7 = arith.constant 0 : index
    %c0_8 = arith.constant 0 : index
    %12 = vector.load %arg4[%c0_7, %c0_8] : memref<128x16xbf16, #tpu.memory_space<vmem>>, vector<128x16xbf16>
    %c0_9 = arith.constant 0 : index
    %c0_10 = arith.constant 0 : index
    %13 = vector.load %arg5[%c0_9, %c0_10] : memref<1x16xf32, #tpu.memory_space<vmem>>, vector<1x16xf32>
    %14 = arith.truncf %11 : vector<8x128xf32> to vector<8x128xbf16>
    %cst_11 = arith.constant dense<0.000000e+00> : vector<8x16xf32>
    %15 = tpu.matmul %14, %12, %cst_11 {dimension_numbers = #tpu.dot_dimension_numbers<[1], [0], [0], [1], [0, 0, 1, 1], [], []>} : vector<8x128xbf16>, vector<128x16xbf16>, vector<8x16xf32> -> vector<8x16xf32>
    %16 = vector.broadcast %13 : vector<1x16xf32> to vector<8x16xf32>
    %17 = arith.addf %15, %16 : vector<8x16xf32>
    %c0_12 = arith.constant 0 : index
    %c0_13 = arith.constant 0 : index
    %18 = vector.load %arg6[%c0_12, %c0_13] : memref<8x16xf32, #tpu.memory_space<vmem>>, vector<8x16xf32>
    tpu.vector_store %arg6[%c0_12, %c0_13], %17 {strides = array<i32>} : memref<8x16xf32, #tpu.memory_space<vmem>>, vector<8x16xf32>,
    return
  }
  func.func @transform_0(%arg0: i32) -> (i32, i32) {
    %c0_i32 = arith.constant 0 : i32
    %c0_i32_0 = arith.constant 0 : i32
    return %arg0, %c0_i32 : i32, i32
  }
  func.func @transform_1(%arg0: i32) -> (i32, i32) {
    %c0_i32 = arith.constant 0 : i32
    %c0_i32_0 = arith.constant 0 : i32
    %c0_i32_1 = arith.constant 0 : i32
    return %c0_i32, %c0_i32_0 : i32, i32
  }
  func.func @transform_2(%arg0: i32) -> (i32, i32) {
    %c0_i32 = arith.constant 0 : i32
    %c0_i32_0 = arith.constant 0 : i32
    %c0_i32_1 = arith.constant 0 : i32
    return %c0_i32, %c0_i32_0 : i32, i32
  }
  func.func @transform_3(%arg0: i32) -> (i32, i32) {
    %c0_i32 = arith.constant 0 : i32
    %c0_i32_0 = arith.constant 0 : i32
    %c0_i32_1 = arith.constant 0 : i32
    return %c0_i32, %c0_i32_0 : i32, i32
  }
  func.func @transform_4(%arg0: i32) -> (i32, i32) {
    %c0_i32 = arith.constant 0 : i32
    %c0_i32_0 = arith.constant 0 : i32
    %c0_i32_1 = arith.constant 0 : i32
    return %c0_i32, %c0_i32_0 : i32, i32
  }
  func.func @transform_5(%arg0: i32) -> (i32, i32) {
    %c0_i32 = arith.constant 0 : i32
    %c0_i32_0 = arith.constant 0 : i32
    return %arg0, %c0_i32 : i32, i32
  }
}

</mosaic_0001>

<llo_original>
// kernel: leapfrog_independent_forward.1
$region0: #{leapfrog_independent_forward.1}
  #allocation0 [shape = 'u32[]', space=smem, size = 0x4, offset = 0x4, fixed_abs, tag = 'smem constant byte address 0x4 - core index']
  #allocation1 [shape = 'u32[144,128]{1,0:T(1,128)}', space=vmem, size = 0x12000, scoped, tag = 'internal scratch']
  %s0 = inlined_call_operand.vmem [shape: f32[8,32], index: 0, kind: input, shape index: {}]
  %s1 = inlined_call_operand.vmem [shape: bf16[32,128], index: 1, kind: input, shape index: {}]
  %s2 = inlined_call_operand.vmem [shape: f32[1,128], index: 2, kind: input, shape index: {}]
  %s3 = inlined_call_operand.vmem [shape: bf16[128,16], index: 3, kind: input, shape index: {}]
  %s4 = inlined_call_operand.vmem [shape: f32[1,16], index: 4, kind: input, shape index: {}]
  %s5 = inlined_call_operand.hbm [shape: f32[8,16], index: 5, kind: output, shape index: {}]
  %s6 = sld [smem:[#allocation0]]
  $region30: #{leapfrog_independent_forward.1} parent=0
    _
  %s8 = ssub.s32 1, %s6
  %s9 = scalar_select 0, %s8, %s6
  $region1: #{leapfrog_independent_forward.1} parent=0
    #allocation2 [shape = 'u8[4096]{0}', space=vmem, size = 0x1000, scoped, tag = 'output window, operand 0, single buffered']
    #allocation3 [shape = 's32[1]{0}', space=sflag, size = 0x4, scoped, tag = 'scoped memory for leapfrog_independent_forward.1']
    %10 = vsyncpa [#allocation3], 0
    // Predicated region
    $region2: #{leapfrog_independent_forward.1} parent=1 // pred_check
      _
    $region3: #{leapfrog_independent_forward.1} parent=1 // pred_check_branch
      %12 = sbr.rel (0) target = $region5
    $region4: #{leapfrog_independent_forward.1} parent=1 // pred_region
      _
    $region5: #{leapfrog_independent_forward.1} parent=1 // pred_fallthru
      _
    // Predicated region
    $region6: #{leapfrog_independent_forward.1} parent=1 // pred_check
      _
    $region7: #{leapfrog_independent_forward.1} parent=1 // pred_check_branch
      %14 = sbr.rel (0) target = $region9
    $region8: #{leapfrog_independent_forward.1} parent=1 // pred_region
      _
    $region9: #{leapfrog_independent_forward.1} parent=1 // pred_fallthru
      _
    // Predicated region
    $region10: #{leapfrog_independent_forward.1} parent=1 // pred_check
      _
    $region11: #{leapfrog_independent_forward.1} parent=1 // pred_check_branch
      %16 = sbr.rel (0) target = $region13
    $region12: #{leapfrog_independent_forward.1} parent=1 // pred_region
      _
    $region13: #{leapfrog_independent_forward.1} parent=1 // pred_fallthru
      _
    // Predicated region
    $region14: #{leapfrog_independent_forward.1} parent=1 // pred_check
      _
    $region15: #{leapfrog_independent_forward.1} parent=1 // pred_check_branch
      %18 = sbr.rel (0) target = $region17
    $region16: #{leapfrog_independent_forward.1} parent=1 // pred_region
      _
    $region17: #{leapfrog_independent_forward.1} parent=1 // pred_fallthru
      _
    // Predicated region
    $region18: #{leapfrog_independent_forward.1} parent=1 // pred_check
      _
    $region19: #{leapfrog_independent_forward.1} parent=1 // pred_check_branch
      %20 = sbr.rel (0) target = $region21
    $region20: #{leapfrog_independent_forward.1} parent=1 // pred_region
      _
    $region21: #{leapfrog_independent_forward.1} parent=1 // pred_fallthru
      _
    %v22 = vld [vmem:[%s0] sm:$0xff]
    %v23 = vld [vmem:[%s1] sm:$0xf]
    %v24 = vld [vmem:[%s1 + $0x4] sm:$0xf]
    %v25 = vld [vmem:[%s1 + $0x8] sm:$0xf]
    %v26 = vld [vmem:[%s1 + $0xc] sm:$0xf]
    %v27 = vld [vmem:[%s2] sm:$0x1]
    %v28 = vpack.c.bf16 %v22, %v22
    %v30 = vlaneseq
    %v31 = vshrl.u32 %v30, 7
    %v32 = vsub.s32 0, %v31
    %v33 = vrot.slane %v27, %v32
    %v39 = vunpack.c.l.b16 %v23
    %v40 = vunpack.c.l.b16 %v24
    %v41 = vunpack.c.l.b16 %v25
    %v42 = vunpack.c.l.b16 %v26
    %v43 = vpack.c.b16 %v40, %v39
    %v44 = vpack.c.b16 %v42, %v41
    %vm47 = vcmask 261120
    %v49 = vsel %vm47, %v28, 0
    %51 = vmatprep.subr.bf16.mxu0 0
    %52 = vmatpush1.bf16.msra.mxu0 0
    %53 = vmatprep.subr.bf16.mxu0 0
    %54 = vmatpush1.bf16.msra.mxu0 0
    %55 = vmatprep.subr.bf16.mxu0 0
    %56 = vmatpush1.bf16.msra.mxu0 0
    %57 = vmatprep.subr.bf16.mxu0 0
    %58 = vmatpush1.bf16.msra.mxu0 0
    %59 = vmatprep.subr.bf16.mxu0 0
    %60 = vmatpush1.bf16.msra.mxu0 0
    %61 = vmatprep.subr.bf16.mxu0 0
    %62 = vmatpush1.bf16.msra.mxu0 0
    %63 = vmatprep.subr.bf16.mxu0 0
    %64 = vmatpush1.bf16.msra.mxu0 %v44
    %65 = vmatprep.subr.bf16.mxu0 0
    %66 = vmatpush1.bf16.msra.mxu0 %v43
    %67 = vmatprep.subr.bf16.mxu0 0
    %68 = vmatpush2.bf16.msra.mxu0 0
    %69 = vmatprep.subr.bf16.mxu0 0
    %70 = vmatpush2.bf16.msra.mxu0 0
    %71 = vmatprep.subr.bf16.mxu0 0
    %72 = vmatpush2.bf16.msra.mxu0 0
    %73 = vmatprep.subr.bf16.mxu0 0
    %74 = vmatpush2.bf16.msra.mxu0 0
    %75 = vmatprep.subr.bf16.mxu0 0
    %76 = vmatpush2.bf16.msra.mxu0 0
    %77 = vmatprep.subr.bf16.mxu0 0
    %78 = vmatpush2.bf16.msra.mxu0 0
    %79 = vmatprep.subr.bf16.mxu0 0
    %80 = vmatpush2.bf16.msra.mxu0 0
    %81 = vmatprep.subr.bf16.mxu0 0
    %82 = vmatpush2.bf16.msra.mxu0 0
    %83 = vmatprep.mubr.bf16.mxu0 0
    %84 = vmatmul.mubr.bf16.gmra.mxu0 %v49
    %v85 = vpop.f32.mrf.mxu0
    %v86 = vadd.f32 %v33, %v85
    %v87 = vpop.f32.mrf.mxu0
    %v88 = vpop.f32.mrf.mxu0
    %v89 = vpop.f32.mrf.mxu0
    %90 = vdwg.mxu0
    %vm91 = vcmp.ge.f32.partialorder %v86, 0.0
    %v92 = vmul.f32 %v86, 0.01
    %v93 = vsel %vm91, %v86, %v92
    %v94 = vld [vmem:[%s3] sm:$0xf]
    %v95 = vld [vmem:[%s3 + $0x4] sm:$0xf]
    %v96 = vld [vmem:[%s3 + $0x8] sm:$0xf]
    %v97 = vld [vmem:[%s3 + $0xc] sm:$0xf]
    %v98 = vld [vmem:[%s3 + $0x10] sm:$0xf]
    %v99 = vld [vmem:[%s3 + $0x14] sm:$0xf]
    %v100 = vld [vmem:[%s3 + $0x18] sm:$0xf]
    %v101 = vld [vmem:[%s3 + $0x1c] sm:$0xf]
    %v102 = vld [vmem:[%s3 + $0x20] sm:$0xf]
    %v103 = vld [vmem:[%s3 + $0x24] sm:$0xf]
    %v104 = vld [vmem:[%s3 + $0x28] sm:$0xf]
    %v105 = vld [vmem:[%s3 + $0x2c] sm:$0xf]
    %v106 = vld [vmem:[%s3 + $0x30] sm:$0xf]
    %v107 = vld [vmem:[%s3 + $0x34] sm:$0xf]
    %v108 = vld [vmem:[%s3 + $0x38] sm:$0xf]
    %v109 = vld [vmem:[%s3 + $0x3c] sm:$0xf]
    %v110 = vld [vmem:[%s4] sm:$0x1]
    %v111 = vpack.c.bf16 %v93, %v93
    %v113 = vlaneseq
    %v114 = vshrl.u32 %v113, 7
    %v115 = vsub.s32 0, %v114
    %v116 = vrot.slane %v110, %v115
    %v134 = vunpack.c.l.b16 %v94
    %v135 = vunpack.c.l.b16 %v95
    %v136 = vunpack.c.l.b16 %v96
    %v137 = vunpack.c.l.b16 %v97
    %v138 = vunpack.c.l.b16 %v98
    %v139 = vunpack.c.l.b16 %v99
    %v140 = vunpack.c.l.b16 %v100
    %v141 = vunpack.c.l.b16 %v101
    %v142 = vunpack.c.l.b16 %v102
    %v143 = vunpack.c.l.b16 %v103
    %v144 = vunpack.c.l.b16 %v104
    %v145 = vunpack.c.l.b16 %v105
    %v146 = vunpack.c.l.b16 %v106
    %v147 = vunpack.c.l.b16 %v107
    %v148 = vunpack.c.l.b16 %v108
    %v149 = vunpack.c.l.b16 %v109
    %v150 = vpack.c.b16 %v135, %v134
    %v151 = vpack.c.b16 %v137, %v136
    %v152 = vpack.c.b16 %v139, %v138
    %v153 = vpack.c.b16 %v141, %v140
    %v154 = vpack.c.b16 %v143, %v142
    %v155 = vpack.c.b16 %v145, %v144
    %v156 = vpack.c.b16 %v147, %v146
    %v157 = vpack.c.b16 %v149, %v148
    %166 = vmatprep.subr.bf16.mxu0 0
    %167 = vmatpush1.bf16.msra.mxu0 %v157
    %168 = vmatprep.subr.bf16.mxu0 0
    %169 = vmatpush1.bf16.msra.mxu0 %v156
    %170 = vmatprep.subr.bf16.mxu0 0
    %171 = vmatpush1.bf16.msra.mxu0 %v155
    %172 = vmatprep.subr.bf16.mxu0 0
    %173 = vmatpush1.bf16.msra.mxu0 %v154
    %174 = vmatprep.subr.bf16.mxu0 0
    %175 = vmatpush1.bf16.msra.mxu0 %v153
    %176 = vmatprep.subr.bf16.mxu0 0
    %177 = vmatpush1.bf16.msra.mxu0 %v152
    %178 = vmatprep.subr.bf16.mxu0 0
    %179 = vmatpush1.bf16.msra.mxu0 %v151
    %180 = vmatprep.subr.bf16.mxu0 0
    %181 = vmatpush1.bf16.msra.mxu0 %v150
    %182 = vmatprep.subr.bf16.mxu0 0
    %183 = vmatpush2.bf16.msra.mxu0 0
    %184 = vmatprep.subr.bf16.mxu0 0
    %185 = vmatpush2.bf16.msra.mxu0 0
    %186 = vmatprep.subr.bf16.mxu0 0
    %187 = vmatpush2.bf16.msra.mxu0 0
    %188 = vmatprep.subr.bf16.mxu0 0
    %189 = vmatpush2.bf16.msra.mxu0 0
    %190 = vmatprep.subr.bf16.mxu0 0
    %191 = vmatpush2.bf16.msra.mxu0 0
    %192 = vmatprep.subr.bf16.mxu0 0
    %193 = vmatpush2.bf16.msra.mxu0 0
    %194 = vmatprep.subr.bf16.mxu0 0
    %195 = vmatpush2.bf16.msra.mxu0 0
    %196 = vmatprep.subr.bf16.mxu0 0
    %197 = vmatpush2.bf16.msra.mxu0 0
    %198 = vmatprep.mubr.bf16.mxu0 0
    %199 = vmatmul.mubr.bf16.gmra.mxu0 %v111
    %v200 = vpop.f32.mrf.mxu0
    %v201 = vadd.f32 %v116, %v200
    %v202 = vpop.f32.mrf.mxu0
    %v203 = vpop.f32.mrf.mxu0
    %v204 = vpop.f32.mrf.mxu0
    %205 = vdwg.mxu0
    %vm206 = vcmask 130048
    %207 = vst.msk [vmem:[#allocation2] sm:$0xff] %vm206, %v201
    // Predicated region
    $region22: #{leapfrog_independent_forward.1} parent=1 // pred_check
      _
    $region23: #{leapfrog_independent_forward.1} parent=1 // pred_check_branch
      %209 = sbr.rel (0) target = $region25
    $region24: #{leapfrog_independent_forward.1} parent=1 // pred_region
      %s211 = ssub.s32 128, 128
      %212 = vsyncadd [#allocation3], %s211
      %s214 = sshll.u32 [#allocation2], 4
      %s215 = int_to_ptr.vmem [resolvable:$true] %s214
      %217 = dma.vmem_to_hbm [thread:$0]  %s215, 128, %s5, [#allocation3]
    $region25: #{leapfrog_independent_forward.1} parent=1 // pred_fallthru
      _
    // Predicated region
    $region26: #{leapfrog_independent_forward.1} parent=1 // pred_check
      _
    $region27: #{leapfrog_independent_forward.1} parent=1 // pred_check_branch
      %219 = sbr.rel (0) target = $region29
    $region28: #{leapfrog_independent_forward.1} parent=1 // pred_region
      %220 = dma.done [#allocation3], 128
    $region29: #{leapfrog_independent_forward.1} parent=1 // pred_fallthru
      _
    %221 = vsyncpa [#allocation3], 1

</llo_original>
